<compile_context>
chip_gen: v6e
topology: v6e:2x2x1
jax: 0.10.0
libtpu: 0.0.40
codegen_flags: <defaults>
</compile_context>

<pallas_src>
import jax
import jax.numpy as jnp
from jax.experimental import pallas as pl
from jax.experimental.pallas import tpu as pltpu


def _round_up(x, m):
    return ((x + m - 1) // m) * m


def coma_critic_kernel(x_ref, w1_ref, b1_ref, w2_ref, b2_ref, w3_ref, b3_ref,
                       q_ref):
    # x_ref: [TB, IN] f32; weights bf16; biases f32; q_ref: [TB, N_ACTIONS] f32
    # In-kernel bf16 cast: the VPU slot is idle in this HBM-bound kernel, and it
    # avoids a separate wrapper-side cast pass over the input in HBM.
    x = x_ref[...].astype(jnp.bfloat16)
    # fc1 + ReLU (f32 accumulation, f32 elementwise)
    h1 = jnp.dot(x, w1_ref[...], preferred_element_type=jnp.float32)
    h1 = jnp.maximum(h1 + b1_ref[...], 0.0)
    # fc2 + ReLU
    h2 = jnp.dot(h1.astype(jnp.bfloat16), w2_ref[...],
                 preferred_element_type=jnp.float32)
    h2 = jnp.maximum(h2 + b2_ref[...], 0.0)
    # fc3 (no activation) -> joint Q-values, narrow (n_actions) lane store
    q = jnp.dot(h2.astype(jnp.bfloat16), w3_ref[...],
                preferred_element_type=jnp.float32)
    q_ref[...] = (q + b3_ref[...]).astype(q_ref.dtype)


def coma_critic_forward(inputs, params, *, tb=None):
    """inputs: [B, input_shape] float32; params: dict of f32 weights/biases.

    Returns [B, n_actions] float32 joint Q-values.
    """
    w1 = params["w1"].astype(jnp.bfloat16)
    w2 = params["w2"].astype(jnp.bfloat16)
    w3 = params["w3"].astype(jnp.bfloat16)
    b1 = params["b1"].astype(jnp.float32)
    b2 = params["b2"].astype(jnp.float32)
    b3 = params["b3"].astype(jnp.float32)

    x = inputs.astype(jnp.float32)
    B, in_dim = x.shape
    hidden = w1.shape[1]
    n_actions = w3.shape[1]

    # Batch tile: big enough to amortize the ~0.35us/step pipeline overhead,
    # capped at 2048 rows and chosen so the grid has >= ~4 steps when the batch
    # allows (v7x shards the "parallel" grid axis across its 2 TensorCores).
    # Even tb=2048 is <1 MiB of double-buffered VMEM here.
    if tb is None:
        tb = min(2048, max(8, _round_up(pl.cdiv(B, 4), 8)))
    tb = max(8, min(int(tb), _round_up(B, 8)))  # sublane-aligned, <= batch

    # No explicit batch padding: Pallas masks the partial last tile (rows are
    # independent; out-of-bounds writes are discarded).
    grid = (pl.cdiv(B, tb),)

    # Weights / biases get constant index_maps -> stay resident in VMEM across
    # all batch tiles; only x / q stream through the pipeline.
    const = lambda i: (0, 0)
    in_specs = [
        pl.BlockSpec((tb, in_dim), lambda i: (i, 0)),   # x (streamed)
        pl.BlockSpec((in_dim, hidden), const),          # w1
        pl.BlockSpec((1, hidden), const),               # b1
        pl.BlockSpec((hidden, hidden), const),          # w2
        pl.BlockSpec((1, hidden), const),               # b2
        pl.BlockSpec((hidden, n_actions), const),       # w3
        pl.BlockSpec((1, n_actions), const),            # b3
    ]
    # n_actions is the full last dim -> one contiguous HBM DMA per output tile.
    out_spec = pl.BlockSpec((tb, n_actions), lambda i: (i, 0))

    q = pl.pallas_call(
        coma_critic_kernel,
        out_shape=jax.ShapeDtypeStruct((B, n_actions), jnp.float32),
        grid=grid,
        in_specs=in_specs,
        out_specs=out_spec,
        compiler_params=pltpu.CompilerParams(
            dimension_semantics=("parallel",)),  # megacore on v7x; no-op v5e/v6e
    )(x, w1, b1, w2, b2, w3, b3)

    return q


def init_params(key, input_shape, critic_dim, n_actions):
    """Deterministic init mimicking nn.Linear default (uniform +-1/sqrt(fan_in)).
    Weights stored as [in, out] (transposed vs. PyTorch's [out, in])."""
    ks = jax.random.split(key, 6)

    def lin(kw, kb, fan_in, fan_out):
        bound = 1.0 / jnp.sqrt(fan_in)
        w = jax.random.uniform(kw, (fan_in, fan_out), jnp.float32, -bound, bound)
        b = jax.random.uniform(kb, (1, fan_out), jnp.float32, -bound, bound)
        return w, b

    w1, b1 = lin(ks[0], ks[1], input_shape, critic_dim)
    w2, b2 = lin(ks[2], ks[3], critic_dim, critic_dim)
    w3, b3 = lin(ks[4], ks[5], critic_dim, n_actions)
    return {"w1": w1, "b1": b1, "w2": w2, "b2": b2, "w3": w3, "b3": b3}


def reference_forward(inputs, params):
    """Same math as the kernel (bf16 MXU inputs, f32 accumulation/elementwise).
    NOTE: a true f32 PyTorch ComaCritic differs from this by ~1e-2 relative
    due to the bf16 MXU inputs."""
    bf = jnp.bfloat16
    x = inputs.astype(bf)
    h1 = jnp.dot(x, params["w1"].astype(bf),
                 preferred_element_type=jnp.float32) + params["b1"]
    h1 = jnp.maximum(h1, 0.0)
    h2 = jnp.dot(h1.astype(bf), params["w2"].astype(bf),
                 preferred_element_type=jnp.float32) + params["b2"]
    h2 = jnp.maximum(h2, 0.0)
    return jnp.dot(h2.astype(bf), params["w3"].astype(bf),
                   preferred_element_type=jnp.float32) + params["b3"]


if __name__ == "__main__":
    # Small shapes consistent with the module:
    # input_shape = concat(state, obs, other-agents' actions, agent one-hot,
    #                      last actions) -> 48; critic_dim=32; n_actions=8
    B, INPUT_SHAPE, CRITIC_DIM, N_ACTIONS = 8, 48, 32, 8

    key = jax.random.PRNGKey(0)
    k_in, k_params, k_big = jax.random.split(key, 3)
    params = init_params(k_params, INPUT_SHAPE, CRITIC_DIM, N_ACTIONS)

    # --- small batch (single grid step) ---
    inputs = jax.random.normal(k_in, (B, INPUT_SHAPE), jnp.float32)
    q = jax.block_until_ready(coma_critic_forward(inputs, params))
    q_ref = reference_forward(inputs, params)
    assert q.shape == (B, N_ACTIONS)
    assert jnp.allclose(q, q_ref, atol=1e-2, rtol=1e-2), "mismatch (small batch)"

    # --- larger flattened batch (agents*envs*timesteps): exercises grid > 1
    #     and the masked partial last tile (300 is not a multiple of the tile) ---
    B_BIG = 300
    inputs_big = jax.random.normal(k_big, (B_BIG, INPUT_SHAPE), jnp.float32)
    q_big = jax.block_until_ready(coma_critic_forward(inputs_big, params))
    q_big_ref = reference_forward(inputs_big, params)
    assert q_big.shape == (B_BIG, N_ACTIONS)
    assert jnp.allclose(q_big, q_big_ref, atol=1e-2, rtol=1e-2), \
        "mismatch (large batch, auto tile)"

    # --- explicit tile override (swept parameter) still correct ---
    q_big2 = jax.block_until_ready(coma_critic_forward(inputs_big, params, tb=128))
    assert jnp.allclose(q_big2, q_big_ref, atol=1e-2, rtol=1e-2), \
        "mismatch (large batch, tb=128)"

    print("KERNEL_OK")
</pallas_src>

<mosaic_0001>
module attributes {stable_mosaic.version = 11 : i64} {
  func.func @coma_critic_kernel(%arg0: i32, %arg1: memref<8x48xf32, #tpu.memory_space<vmem>>, %arg2: memref<48x32xbf16, #tpu.memory_space<vmem>>, %arg3: memref<1x32xf32, #tpu.memory_space<vmem>>, %arg4: memref<32x32xbf16, #tpu.memory_space<vmem>>, %arg5: memref<1x32xf32, #tpu.memory_space<vmem>>, %arg6: memref<32x8xbf16, #tpu.memory_space<vmem>>, %arg7: memref<1x8xf32, #tpu.memory_space<vmem>>, %arg8: memref<8x8xf32, #tpu.memory_space<vmem>>) attributes {dimension_semantics = [#tpu.dimension_semantics<parallel>], iteration_bounds = array<i64: 1>, scalar_prefetch = 0 : i64, scratch_operands = 0 : i64, tpu.core_type = #tpu.core_type<tc>, window_params = [{transform_indices = @transform_0, window_bounds = array<i64: 8, 48>}, {pipeline_mode = #tpu.pipeline_mode<synchronous>, transform_indices = @transform_1, window_bounds = array<i64: 48, 32>}, {pipeline_mode = #tpu.pipeline_mode<synchronous>, transform_indices = @transform_2, window_bounds = array<i64: 1, 32>}, {pipeline_mode = #tpu.pipeline_mode<synchronous>, transform_indices = @transform_3, window_bounds = array<i64: 32, 32>}, {pipeline_mode = #tpu.pipeline_mode<synchronous>, transform_indices = @transform_4, window_bounds = array<i64: 1, 32>}, {pipeline_mode = #tpu.pipeline_mode<synchronous>, transform_indices = @transform_5, window_bounds = array<i64: 32, 8>}, {pipeline_mode = #tpu.pipeline_mode<synchronous>, transform_indices = @transform_6, window_bounds = array<i64: 1, 8>}, {transform_indices = @transform_7, window_bounds = array<i64: 8, 8>}]} {
    %c0 = arith.constant 0 : index
    %c0_0 = arith.constant 0 : index
    %0 = vector.load %arg1[%c0, %c0_0] : memref<8x48xf32, #tpu.memory_space<vmem>>, vector<8x48xf32>
    %1 = arith.truncf %0 : vector<8x48xf32> to vector<8x48xbf16>
    %c0_1 = arith.constant 0 : index
    %c0_2 = arith.constant 0 : index
    %2 = vector.load %arg2[%c0_1, %c0_2] : memref<48x32xbf16, #tpu.memory_space<vmem>>, vector<48x32xbf16>
    %cst = arith.constant dense<0.000000e+00> : vector<8x32xf32>
    %3 = tpu.matmul %1, %2, %cst {dimension_numbers = #tpu.dot_dimension_numbers<[1], [0], [0], [1], [0, 0, 1, 1], [], []>} : vector<8x48xbf16>, vector<48x32xbf16>, vector<8x32xf32> -> vector<8x32xf32>
    %c0_3 = arith.constant 0 : index
    %c0_4 = arith.constant 0 : index
    %4 = vector.load %arg3[%c0_3, %c0_4] : memref<1x32xf32, #tpu.memory_space<vmem>>, vector<1x32xf32>
    %5 = vector.broadcast %4 : vector<1x32xf32> to vector<8x32xf32>
    %6 = arith.addf %3, %5 : vector<8x32xf32>
    %cst_5 = arith.constant 0.000000e+00 : f32
    %7 = vector.broadcast %cst_5 : f32 to vector<8x32xf32>
    %8 = arith.maximumf %6, %7 : vector<8x32xf32>
    %9 = arith.truncf %8 : vector<8x32xf32> to vector<8x32xbf16>
    %c0_6 = arith.constant 0 : index
    %c0_7 = arith.constant 0 : index
    %10 = vector.load %arg4[%c0_6, %c0_7] : memref<32x32xbf16, #tpu.memory_space<vmem>>, vector<32x32xbf16>
    %cst_8 = arith.constant dense<0.000000e+00> : vector<8x32xf32>
    %11 = tpu.matmul %9, %10, %cst_8 {dimension_numbers = #tpu.dot_dimension_numbers<[1], [0], [0], [1], [0, 0, 1, 1], [], []>} : vector<8x32xbf16>, vector<32x32xbf16>, vector<8x32xf32> -> vector<8x32xf32>
    %c0_9 = arith.constant 0 : index
    %c0_10 = arith.constant 0 : index
    %12 = vector.load %arg5[%c0_9, %c0_10] : memref<1x32xf32, #tpu.memory_space<vmem>>, vector<1x32xf32>
    %13 = vector.broadcast %12 : vector<1x32xf32> to vector<8x32xf32>
    %14 = arith.addf %11, %13 : vector<8x32xf32>
    %cst_11 = arith.constant 0.000000e+00 : f32
    %15 = vector.broadcast %cst_11 : f32 to vector<8x32xf32>
    %16 = arith.maximumf %14, %15 : vector<8x32xf32>
    %17 = arith.truncf %16 : vector<8x32xf32> to vector<8x32xbf16>
    %c0_12 = arith.constant 0 : index
    %c0_13 = arith.constant 0 : index
    %18 = vector.load %arg6[%c0_12, %c0_13] : memref<32x8xbf16, #tpu.memory_space<vmem>>, vector<32x8xbf16>
    %cst_14 = arith.constant dense<0.000000e+00> : vector<8x8xf32>
    %19 = tpu.matmul %17, %18, %cst_14 {dimension_numbers = #tpu.dot_dimension_numbers<[1], [0], [0], [1], [0, 0, 1, 1], [], []>} : vector<8x32xbf16>, vector<32x8xbf16>, vector<8x8xf32> -> vector<8x8xf32>
    %c0_15 = arith.constant 0 : index
    %c0_16 = arith.constant 0 : index
    %20 = vector.load %arg7[%c0_15, %c0_16] : memref<1x8xf32, #tpu.memory_space<vmem>>, vector<1x8xf32>
    %21 = vector.broadcast %20 : vector<1x8xf32> to vector<8x8xf32>
    %22 = arith.addf %19, %21 : vector<8x8xf32>
    %c0_17 = arith.constant 0 : index
    %c0_18 = arith.constant 0 : index
    %23 = vector.load %arg8[%c0_17, %c0_18] : memref<8x8xf32, #tpu.memory_space<vmem>>, vector<8x8xf32>
    tpu.vector_store %arg8[%c0_17, %c0_18], %22 {strides = array<i32>} : memref<8x8xf32, #tpu.memory_space<vmem>>, vector<8x8xf32>,
    return
  }
  func.func @transform_0(%arg0: i32) -> (i32, i32) {
    %c0_i32 = arith.constant 0 : i32
    %c0_i32_0 = arith.constant 0 : i32
    return %arg0, %c0_i32 : i32, i32
  }
  func.func @transform_1(%arg0: i32) -> (i32, i32) {
    %c0_i32 = arith.constant 0 : i32
    %c0_i32_0 = arith.constant 0 : i32
    %c0_i32_1 = arith.constant 0 : i32
    return %c0_i32, %c0_i32_0 : i32, i32
  }
  func.func @transform_2(%arg0: i32) -> (i32, i32) {
    %c0_i32 = arith.constant 0 : i32
    %c0_i32_0 = arith.constant 0 : i32
    %c0_i32_1 = arith.constant 0 : i32
    return %c0_i32, %c0_i32_0 : i32, i32
  }
  func.func @transform_3(%arg0: i32) -> (i32, i32) {
    %c0_i32 = arith.constant 0 : i32
    %c0_i32_0 = arith.constant 0 : i32
    %c0_i32_1 = arith.constant 0 : i32
    return %c0_i32, %c0_i32_0 : i32, i32
  }
  func.func @transform_4(%arg0: i32) -> (i32, i32) {
    %c0_i32 = arith.constant 0 : i32
    %c0_i32_0 = arith.constant 0 : i32
    %c0_i32_1 = arith.constant 0 : i32
    return %c0_i32, %c0_i32_0 : i32, i32
  }
  func.func @transform_5(%arg0: i32) -> (i32, i32) {
    %c0_i32 = arith.constant 0 : i32
    %c0_i32_0 = arith.constant 0 : i32
    %c0_i32_1 = arith.constant 0 : i32
    return %c0_i32, %c0_i32_0 : i32, i32
  }
  func.func @transform_6(%arg0: i32) -> (i32, i32) {
    %c0_i32 = arith.constant 0 : i32
    %c0_i32_0 = arith.constant 0 : i32
    %c0_i32_1 = arith.constant 0 : i32
    return %c0_i32, %c0_i32_0 : i32, i32
  }
  func.func @transform_7(%arg0: i32) -> (i32, i32) {
    %c0_i32 = arith.constant 0 : i32
    %c0_i32_0 = arith.constant 0 : i32
    return %arg0, %c0_i32 : i32, i32
  }
}

</mosaic_0001>

<llo_original>
// kernel: tpu_custom_call.1
$region0: #{tpu_custom_call.1}
  #allocation0 [shape = 'u32[]', space=smem, size = 0x4, offset = 0x4, fixed_abs, tag = 'smem constant byte address 0x4 - core index']
  #allocation1 [shape = 'u32[144,128]{1,0:T(1,128)}', space=vmem, size = 0x12000, scoped, tag = 'internal scratch']
  %s0 = inlined_call_operand.vmem [shape: f32[8,48], index: 0, kind: input, shape index: {}]
  %s1 = inlined_call_operand.vmem [shape: bf16[48,32], index: 1, kind: input, shape index: {}]
  %s2 = inlined_call_operand.vmem [shape: f32[1,32], index: 2, kind: input, shape index: {}]
  %s3 = inlined_call_operand.vmem [shape: bf16[32,32], index: 3, kind: input, shape index: {}]
  %s4 = inlined_call_operand.vmem [shape: f32[1,32], index: 4, kind: input, shape index: {}]
  %s5 = inlined_call_operand.vmem [shape: bf16[32,8], index: 5, kind: input, shape index: {}]
  %s6 = inlined_call_operand.vmem [shape: f32[1,8], index: 6, kind: input, shape index: {}]
  %s7 = inlined_call_operand.hbm [shape: f32[8,8], index: 7, kind: output, shape index: {}]
  %s8 = sld [smem:[#allocation0]]
  $region38: #{tpu_custom_call.1} parent=0
    _
  %s10 = ssub.s32 1, %s8
  %s11 = scalar_select 0, %s10, %s8
  $region1: #{tpu_custom_call.1} parent=0
    #allocation2 [shape = 'u8[4096]{0}', space=vmem, size = 0x1000, scoped, tag = 'output window, operand 0, single buffered']
    #allocation3 [shape = 's32[1]{0}', space=sflag, size = 0x4, scoped, tag = 'scoped memory for tpu_custom_call.1']
    %12 = vsyncpa [#allocation3], 0
    // Predicated region
    $region2: #{tpu_custom_call.1} parent=1 // pred_check
      _
    $region3: #{tpu_custom_call.1} parent=1 // pred_check_branch
      %14 = sbr.rel (0) target = $region5
    $region4: #{tpu_custom_call.1} parent=1 // pred_region
      _
    $region5: #{tpu_custom_call.1} parent=1 // pred_fallthru
      _
    // Predicated region
    $region6: #{tpu_custom_call.1} parent=1 // pred_check
      _
    $region7: #{tpu_custom_call.1} parent=1 // pred_check_branch
      %16 = sbr.rel (0) target = $region9
    $region8: #{tpu_custom_call.1} parent=1 // pred_region
      _
    $region9: #{tpu_custom_call.1} parent=1 // pred_fallthru
      _
    // Predicated region
    $region10: #{tpu_custom_call.1} parent=1 // pred_check
      _
    $region11: #{tpu_custom_call.1} parent=1 // pred_check_branch
      %18 = sbr.rel (0) target = $region13
    $region12: #{tpu_custom_call.1} parent=1 // pred_region
      _
    $region13: #{tpu_custom_call.1} parent=1 // pred_fallthru
      _
    // Predicated region
    $region14: #{tpu_custom_call.1} parent=1 // pred_check
      _
    $region15: #{tpu_custom_call.1} parent=1 // pred_check_branch
      %20 = sbr.rel (0) target = $region17
    $region16: #{tpu_custom_call.1} parent=1 // pred_region
      _
    $region17: #{tpu_custom_call.1} parent=1 // pred_fallthru
      _
    // Predicated region
    $region18: #{tpu_custom_call.1} parent=1 // pred_check
      _
    $region19: #{tpu_custom_call.1} parent=1 // pred_check_branch
      %22 = sbr.rel (0) target = $region21
    $region20: #{tpu_custom_call.1} parent=1 // pred_region
      _
    $region21: #{tpu_custom_call.1} parent=1 // pred_fallthru
      _
    // Predicated region
    $region22: #{tpu_custom_call.1} parent=1 // pred_check
      _
    $region23: #{tpu_custom_call.1} parent=1 // pred_check_branch
      %24 = sbr.rel (0) target = $region25
    $region24: #{tpu_custom_call.1} parent=1 // pred_region
      _
    $region25: #{tpu_custom_call.1} parent=1 // pred_fallthru
      _
    // Predicated region
    $region26: #{tpu_custom_call.1} parent=1 // pred_check
      _
    $region27: #{tpu_custom_call.1} parent=1 // pred_check_branch
      %26 = sbr.rel (0) target = $region29
    $region28: #{tpu_custom_call.1} parent=1 // pred_region
      _
    $region29: #{tpu_custom_call.1} parent=1 // pred_fallthru
      _
    %v28 = vld [vmem:[%s0] sm:$0xff]
    %v29 = vpack.c.bf16 %v28, %v28
    %v30 = vld [vmem:[%s1] sm:$0xf]
    %v31 = vld [vmem:[%s1 + $0x4] sm:$0xf]
    %v32 = vld [vmem:[%s1 + $0x8] sm:$0xf]
    %v33 = vld [vmem:[%s1 + $0xc] sm:$0xf]
    %v34 = vld [vmem:[%s1 + $0x10] sm:$0xf]
    %v35 = vld [vmem:[%s1 + $0x14] sm:$0xf]
    %v36 = vld [vmem:[%s2] sm:$0x1]
    %v38 = vlaneseq
    %v39 = vshrl.u32 %v38, 7
    %v40 = vsub.s32 0, %v39
    %v41 = vrot.slane %v36, %v40
    %v49 = vunpack.c.l.b16 %v30
    %v50 = vunpack.c.l.b16 %v31
    %v51 = vunpack.c.l.b16 %v32
    %v52 = vunpack.c.l.b16 %v33
    %v53 = vunpack.c.l.b16 %v34
    %v54 = vunpack.c.l.b16 %v35
    %v55 = vpack.c.b16 %v50, %v49
    %v56 = vpack.c.b16 %v52, %v51
    %v57 = vpack.c.b16 %v54, %v53
    %vm61 = vcmask 392192
    %v63 = vsel %vm61, %v29, 0
    %65 = vmatprep.subr.bf16.mxu0 0
    %66 = vmatpush1.bf16.msra.mxu0 0
    %67 = vmatprep.subr.bf16.mxu0 0
    %68 = vmatpush1.bf16.msra.mxu0 0
    %69 = vmatprep.subr.bf16.mxu0 0
    %70 = vmatpush1.bf16.msra.mxu0 0
    %71 = vmatprep.subr.bf16.mxu0 0
    %72 = vmatpush1.bf16.msra.mxu0 0
    %73 = vmatprep.subr.bf16.mxu0 0
    %74 = vmatpush1.bf16.msra.mxu0 0
    %75 = vmatprep.subr.bf16.mxu0 0
    %76 = vmatpush1.bf16.msra.mxu0 %v57
    %77 = vmatprep.subr.bf16.mxu0 0
    %78 = vmatpush1.bf16.msra.mxu0 %v56
    %79 = vmatprep.subr.bf16.mxu0 0
    %80 = vmatpush1.bf16.msra.mxu0 %v55
    %81 = vmatprep.subr.bf16.mxu0 0
    %82 = vmatpush2.bf16.msra.mxu0 0
    %83 = vmatprep.subr.bf16.mxu0 0
    %84 = vmatpush2.bf16.msra.mxu0 0
    %85 = vmatprep.subr.bf16.mxu0 0
    %86 = vmatpush2.bf16.msra.mxu0 0
    %87 = vmatprep.subr.bf16.mxu0 0
    %88 = vmatpush2.bf16.msra.mxu0 0
    %89 = vmatprep.subr.bf16.mxu0 0
    %90 = vmatpush2.bf16.msra.mxu0 0
    %91 = vmatprep.subr.bf16.mxu0 0
    %92 = vmatpush2.bf16.msra.mxu0 0
    %93 = vmatprep.subr.bf16.mxu0 0
    %94 = vmatpush2.bf16.msra.mxu0 0
    %95 = vmatprep.subr.bf16.mxu0 0
    %96 = vmatpush2.bf16.msra.mxu0 0
    %97 = vmatprep.mubr.bf16.mxu0 0
    %98 = vmatmul.mubr.bf16.gmra.mxu0 %v63
    %v99 = vpop.f32.mrf.mxu0
    %v100 = vadd.f32 %v41, %v99
    %v101 = vpop.f32.mrf.mxu0
    %v102 = vpop.f32.mrf.mxu0
    %v103 = vpop.f32.mrf.mxu0
    %104 = vdwg.mxu0
    %v105 = vmax.f32 %v100, 0.0
    %v106 = vpack.c.bf16 %v105, %v105
    %v107 = vld [vmem:[%s3] sm:$0xf]
    %v108 = vld [vmem:[%s3 + $0x4] sm:$0xf]
    %v109 = vld [vmem:[%s3 + $0x8] sm:$0xf]
    %v110 = vld [vmem:[%s3 + $0xc] sm:$0xf]
    %v111 = vld [vmem:[%s4] sm:$0x1]
    %v113 = vlaneseq
    %v114 = vshrl.u32 %v113, 7
    %v115 = vsub.s32 0, %v114
    %v116 = vrot.slane %v111, %v115
    %v122 = vunpack.c.l.b16 %v107
    %v123 = vunpack.c.l.b16 %v108
    %v124 = vunpack.c.l.b16 %v109
    %v125 = vunpack.c.l.b16 %v110
    %v126 = vpack.c.b16 %v123, %v122
    %v127 = vpack.c.b16 %v125, %v124
    %vm130 = vcmask 261120
    %v132 = vsel %vm130, %v106, 0
    %134 = vmatprep.subr.bf16.mxu0 0
    %135 = vmatpush1.bf16.msra.mxu0 0
    %136 = vmatprep.subr.bf16.mxu0 0
    %137 = vmatpush1.bf16.msra.mxu0 0
    %138 = vmatprep.subr.bf16.mxu0 0
    %139 = vmatpush1.bf16.msra.mxu0 0
    %140 = vmatprep.subr.bf16.mxu0 0
    %141 = vmatpush1.bf16.msra.mxu0 0
    %142 = vmatprep.subr.bf16.mxu0 0
    %143 = vmatpush1.bf16.msra.mxu0 0
    %144 = vmatprep.subr.bf16.mxu0 0
    %145 = vmatpush1.bf16.msra.mxu0 0
    %146 = vmatprep.subr.bf16.mxu0 0
    %147 = vmatpush1.bf16.msra.mxu0 %v127
    %148 = vmatprep.subr.bf16.mxu0 0
    %149 = vmatpush1.bf16.msra.mxu0 %v126
    %150 = vmatprep.subr.bf16.mxu0 0
    %151 = vmatpush2.bf16.msra.mxu0 0
    %152 = vmatprep.subr.bf16.mxu0 0
    %153 = vmatpush2.bf16.msra.mxu0 0
    %154 = vmatprep.subr.bf16.mxu0 0
    %155 = vmatpush2.bf16.msra.mxu0 0
    %156 = vmatprep.subr.bf16.mxu0 0
    %157 = vmatpush2.bf16.msra.mxu0 0
    %158 = vmatprep.subr.bf16.mxu0 0
    %159 = vmatpush2.bf16.msra.mxu0 0
    %160 = vmatprep.subr.bf16.mxu0 0
    %161 = vmatpush2.bf16.msra.mxu0 0
    %162 = vmatprep.subr.bf16.mxu0 0
    %163 = vmatpush2.bf16.msra.mxu0 0
    %164 = vmatprep.subr.bf16.mxu0 0
    %165 = vmatpush2.bf16.msra.mxu0 0
    %166 = vmatprep.mubr.bf16.mxu0 0
    %167 = vmatmul.mubr.bf16.gmra.mxu0 %v132
    %v168 = vpop.f32.mrf.mxu0
    %v169 = vadd.f32 %v116, %v168
    %v170 = vpop.f32.mrf.mxu0
    %v171 = vpop.f32.mrf.mxu0
    %v172 = vpop.f32.mrf.mxu0
    %173 = vdwg.mxu0
    %v174 = vmax.f32 %v169, 0.0
    %v175 = vpack.c.bf16 %v174, %v174
    %v176 = vld [vmem:[%s5] sm:$0xf]
    %v177 = vld [vmem:[%s5 + $0x4] sm:$0xf]
    %v178 = vld [vmem:[%s5 + $0x8] sm:$0xf]
    %v179 = vld [vmem:[%s5 + $0xc] sm:$0xf]
    %v180 = vld [vmem:[%s6] sm:$0x1]
    %v182 = vlaneseq
    %v183 = vshrl.u32 %v182, 7
    %v184 = vsub.s32 0, %v183
    %v185 = vrot.slane %v180, %v184
    %v191 = vunpack.c.l.b16 %v176
    %v192 = vunpack.c.l.b16 %v177
    %v193 = vunpack.c.l.b16 %v178
    %v194 = vunpack.c.l.b16 %v179
    %v195 = vpack.c.b16 %v192, %v191
    %v196 = vpack.c.b16 %v194, %v193
    %v200 = vsel %vm130, %v175, 0
    %202 = vmatprep.subr.bf16.mxu0 0
    %203 = vmatpush1.bf16.msra.mxu0 0
    %204 = vmatprep.subr.bf16.mxu0 0
    %205 = vmatpush1.bf16.msra.mxu0 0
    %206 = vmatprep.subr.bf16.mxu0 0
    %207 = vmatpush1.bf16.msra.mxu0 0
    %208 = vmatprep.subr.bf16.mxu0 0
    %209 = vmatpush1.bf16.msra.mxu0 0
    %210 = vmatprep.subr.bf16.mxu0 0
    %211 = vmatpush1.bf16.msra.mxu0 0
    %212 = vmatprep.subr.bf16.mxu0 0
    %213 = vmatpush1.bf16.msra.mxu0 0
    %214 = vmatprep.subr.bf16.mxu0 0
    %215 = vmatpush1.bf16.msra.mxu0 %v196
    %216 = vmatprep.subr.bf16.mxu0 0
    %217 = vmatpush1.bf16.msra.mxu0 %v195
    %218 = vmatprep.subr.bf16.mxu0 0
    %219 = vmatpush2.bf16.msra.mxu0 0
    %220 = vmatprep.subr.bf16.mxu0 0
    %221 = vmatpush2.bf16.msra.mxu0 0
    %222 = vmatprep.subr.bf16.mxu0 0
    %223 = vmatpush2.bf16.msra.mxu0 0
    %224 = vmatprep.subr.bf16.mxu0 0
    %225 = vmatpush2.bf16.msra.mxu0 0
    %226 = vmatprep.subr.bf16.mxu0 0
    %227 = vmatpush2.bf16.msra.mxu0 0
    %228 = vmatprep.subr.bf16.mxu0 0
    %229 = vmatpush2.bf16.msra.mxu0 0
    %230 = vmatprep.subr.bf16.mxu0 0
    %231 = vmatpush2.bf16.msra.mxu0 0
    %232 = vmatprep.subr.bf16.mxu0 0
    %233 = vmatpush2.bf16.msra.mxu0 0
    %234 = vmatprep.mubr.bf16.mxu0 0
    %235 = vmatmul.mubr.bf16.gmra.mxu0 %v200
    %v236 = vpop.f32.mrf.mxu0
    %v237 = vadd.f32 %v185, %v236
    %v238 = vpop.f32.mrf.mxu0
    %v239 = vpop.f32.mrf.mxu0
    %v240 = vpop.f32.mrf.mxu0
    %241 = vdwg.mxu0
    %vm242 = vcmask 64512
    %243 = vst.msk [vmem:[#allocation2] sm:$0xff] %vm242, %v237
    // Predicated region
    $region30: #{tpu_custom_call.1} parent=1 // pred_check
      _
    $region31: #{tpu_custom_call.1} parent=1 // pred_check_branch
      %245 = sbr.rel (0) target = $region33
    $region32: #{tpu_custom_call.1} parent=1 // pred_region
      %s247 = ssub.s32 128, 128
      %248 = vsyncadd [#allocation3], %s247
      %s250 = sshll.u32 [#allocation2], 4
      %s251 = int_to_ptr.vmem [resolvable:$true] %s250
      %253 = dma.vmem_to_hbm [thread:$0]  %s251, 128, %s7, [#allocation3]
    $region33: #{tpu_custom_call.1} parent=1 // pred_fallthru
      _
    // Predicated region
    $region34: #{tpu_custom_call.1} parent=1 // pred_check
      _
    $region35: #{tpu_custom_call.1} parent=1 // pred_check_branch
      %255 = sbr.rel (0) target = $region37
    $region36: #{tpu_custom_call.1} parent=1 // pred_region
      %256 = dma.done [#allocation3], 128
    $region37: #{tpu_custom_call.1} parent=1 // pred_fallthru
      _
    %257 = vsyncpa [#allocation3], 1

</llo_original>
